<compile_context>
chip_gen: v7x
topology: tpu7x:2x2x1
jax: 0.10.0
libtpu: 0.0.40
codegen_flags: <defaults>
</compile_context>

<pallas_src>
import math

import jax
import jax.numpy as jnp
from jax.experimental import pallas as pl
from jax.experimental.pallas import tpu as pltpu


HIDDEN = (256, 512, 256)
LANE = 128


def _round_up(x, m):
    return ((x + m - 1) // m) * m


def _mlp_kernel(x_ref,
                w1_ref, b1_ref,
                w2_ref, b2_ref,
                w3_ref, b3_ref,
                w4_ref, b4_ref,
                o_ref):
    # x_ref: [TB, state_dim] bf16; weights bf16 [in,out]; biases f32 [1,out].
    x = x_ref[...]

    h = jnp.dot(x, w1_ref[...], preferred_element_type=jnp.float32) + b1_ref[...]
    h = jnp.maximum(h, 0.0).astype(jnp.bfloat16)

    h = jnp.dot(h, w2_ref[...], preferred_element_type=jnp.float32) + b2_ref[...]
    h = jnp.maximum(h, 0.0).astype(jnp.bfloat16)

    h = jnp.dot(h, w3_ref[...], preferred_element_type=jnp.float32) + b3_ref[...]
    h = jnp.maximum(h, 0.0).astype(jnp.bfloat16)

    h = jnp.dot(h, w4_ref[...], preferred_element_type=jnp.float32) + b4_ref[...]

    o_ref[...] = h.astype(o_ref.dtype)


def fully_connected_forward(x, params, action_dim, *, max_block_b=256):
    """x: [B, state_dim] float32 -> [B, action_dim] float32."""
    B, state_dim = x.shape
    out_pad = params["w4"].shape[1]

    # Batch tile: multiple of 8 sublanes, capped (VMEM-safe on v5e/v6e/v7x).
    tb = min(max_block_b, _round_up(B, 8))
    b_pad = _round_up(B, tb)
    if b_pad != B:
        x = jnp.pad(x, ((0, b_pad - B), (0, 0)))
    x = x.astype(jnp.bfloat16)

    grid = (b_pad // tb,)

    weights = (params["w1"], params["b1"],
               params["w2"], params["b2"],
               params["w3"], params["b3"],
               params["w4"], params["b4"])

    # Weight / bias blocks are constant across the grid -> stay VMEM resident.
    const_specs = [pl.BlockSpec(w.shape, lambda i: (0, 0)) for w in weights]
    in_specs = [pl.BlockSpec((tb, state_dim), lambda i: (i, 0))] + const_specs
    out_specs = pl.BlockSpec((tb, out_pad), lambda i: (i, 0))

    # Advisory cost for XLA scheduling.
    flops = 2 * b_pad * (state_dim * HIDDEN[0]
                         + HIDDEN[0] * HIDDEN[1]
                         + HIDDEN[1] * HIDDEN[2]
                         + HIDDEN[2] * out_pad)
    weight_bytes = sum(int(w.size) * w.dtype.itemsize for w in weights)
    act_bytes = b_pad * (state_dim * 2 + out_pad * 4)
    cost = pl.CostEstimate(flops=flops, transcendentals=0,
                           bytes_accessed=weight_bytes + act_bytes)

    out = pl.pallas_call(
        _mlp_kernel,
        out_shape=jax.ShapeDtypeStruct((b_pad, out_pad), jnp.float32),
        grid=grid,
        in_specs=in_specs,
        out_specs=out_specs,
        compiler_params=pltpu.CompilerParams(
            dimension_semantics=("parallel",)),
        cost_estimate=cost,
    )(x, *weights)

    return out[:B, :action_dim]


def _xavier_uniform(key, fan_in, fan_out):
    # matches torch.nn.init.xavier_uniform_ (gain=1); stored [in, out]
    limit = math.sqrt(6.0 / (fan_in + fan_out))
    return jax.random.uniform(key, (fan_in, fan_out), jnp.float32, -limit, limit)


def _linear_bias(key, fan_in, fan_out):
    # matches nn.Linear default bias init: U(-1/sqrt(fan_in), 1/sqrt(fan_in))
    bound = 1.0 / math.sqrt(fan_in)
    return jax.random.uniform(key, (1, fan_out), jnp.float32, -bound, bound)


def init_params(key, state_dim, action_dim):
    dims = [(state_dim, HIDDEN[0]),
            (HIDDEN[0], HIDDEN[1]),
            (HIDDEN[1], HIDDEN[2]),
            (HIDDEN[2], action_dim)]
    keys = jax.random.split(key, 2 * len(dims))
    params = {}
    for i, (fi, fo) in enumerate(dims):
        w = _xavier_uniform(keys[2 * i], fi, fo)
        b = _linear_bias(keys[2 * i + 1], fi, fo)
        if i == len(dims) - 1:
            # Lane-pad the final layer so the kernel output is 128-lane dense.
            fo_pad = _round_up(fo, LANE)
            w = jnp.pad(w, ((0, 0), (0, fo_pad - fo)))
            b = jnp.pad(b, ((0, 0), (0, fo_pad - fo)))
        params[f"w{i + 1}"] = w.astype(jnp.bfloat16)   # bf16 weights (DMA-bound)
        params[f"b{i + 1}"] = b                         # f32 biases
    return params


def reference_forward(x, params, action_dim):
    # f32 math with the same (bf16) weights upcast — defines expected semantics.
    w1 = params["w1"].astype(jnp.float32)
    w2 = params["w2"].astype(jnp.float32)
    w3 = params["w3"].astype(jnp.float32)
    w4 = params["w4"].astype(jnp.float32)
    h = jnp.maximum(x @ w1 + params["b1"], 0.0)
    h = jnp.maximum(h @ w2 + params["b2"], 0.0)
    h = jnp.maximum(h @ w3 + params["b3"], 0.0)
    return (h @ w4 + params["b4"])[:, :action_dim]


if __name__ == "__main__":
    key = jax.random.PRNGKey(0)
    k_param, k_x = jax.random.split(key)

    batch = 8
    state_dim = 16
    action_dim = 4

    params = init_params(k_param, state_dim, action_dim)
    x = jax.random.normal(k_x, (batch, state_dim), jnp.float32)

    out = fully_connected_forward(x, params, action_dim)
    out = jax.block_until_ready(out)

    ref = reference_forward(x, params, action_dim)
    assert out.shape == (batch, action_dim)
    # bf16 activations between layers -> relaxed tolerance vs f32 reference.
    assert jnp.allclose(out, ref, atol=2e-2, rtol=2e-2), (
        float(jnp.max(jnp.abs(out - ref))))

    print("KERNEL_OK")
</pallas_src>

<mosaic_0001>
module attributes {stable_mosaic.version = 11 : i64} {
  func.func @_mlp_kernel(%arg0: i32, %arg1: memref<8x16xbf16, #tpu.memory_space<vmem>>, %arg2: memref<16x256xbf16, #tpu.memory_space<vmem>>, %arg3: memref<1x256xf32, #tpu.memory_space<vmem>>, %arg4: memref<256x512xbf16, #tpu.memory_space<vmem>>, %arg5: memref<1x512xf32, #tpu.memory_space<vmem>>, %arg6: memref<512x256xbf16, #tpu.memory_space<vmem>>, %arg7: memref<1x256xf32, #tpu.memory_space<vmem>>, %arg8: memref<256x128xbf16, #tpu.memory_space<vmem>>, %arg9: memref<1x128xf32, #tpu.memory_space<vmem>>, %arg10: memref<8x128xf32, #tpu.memory_space<vmem>>) attributes {dimension_semantics = [#tpu.dimension_semantics<parallel>], iteration_bounds = array<i64: 1>, scalar_prefetch = 0 : i64, scratch_operands = 0 : i64, tpu.core_type = #tpu.core_type<tc>, window_params = [{transform_indices = @transform_0, window_bounds = array<i64: 8, 16>}, {pipeline_mode = #tpu.pipeline_mode<synchronous>, transform_indices = @transform_1, window_bounds = array<i64: 16, 256>}, {pipeline_mode = #tpu.pipeline_mode<synchronous>, transform_indices = @transform_2, window_bounds = array<i64: 1, 256>}, {pipeline_mode = #tpu.pipeline_mode<synchronous>, transform_indices = @transform_3, window_bounds = array<i64: 256, 512>}, {pipeline_mode = #tpu.pipeline_mode<synchronous>, transform_indices = @transform_4, window_bounds = array<i64: 1, 512>}, {pipeline_mode = #tpu.pipeline_mode<synchronous>, transform_indices = @transform_5, window_bounds = array<i64: 512, 256>}, {pipeline_mode = #tpu.pipeline_mode<synchronous>, transform_indices = @transform_6, window_bounds = array<i64: 1, 256>}, {pipeline_mode = #tpu.pipeline_mode<synchronous>, transform_indices = @transform_7, window_bounds = array<i64: 256, 128>}, {pipeline_mode = #tpu.pipeline_mode<synchronous>, transform_indices = @transform_8, window_bounds = array<i64: 1, 128>}, {transform_indices = @transform_9, window_bounds = array<i64: 8, 128>}]} {
    %c0 = arith.constant 0 : index
    %c0_0 = arith.constant 0 : index
    %0 = vector.load %arg1[%c0, %c0_0] : memref<8x16xbf16, #tpu.memory_space<vmem>>, vector<8x16xbf16>
    %c0_1 = arith.constant 0 : index
    %c0_2 = arith.constant 0 : index
    %1 = vector.load %arg2[%c0_1, %c0_2] : memref<16x256xbf16, #tpu.memory_space<vmem>>, vector<16x256xbf16>
    %cst = arith.constant dense<0.000000e+00> : vector<8x256xf32>
    %2 = tpu.matmul %0, %1, %cst {dimension_numbers = #tpu.dot_dimension_numbers<[1], [0], [0], [1], [0, 0, 1, 1], [], []>} : vector<8x16xbf16>, vector<16x256xbf16>, vector<8x256xf32> -> vector<8x256xf32>
    %c0_3 = arith.constant 0 : index
    %c0_4 = arith.constant 0 : index
    %3 = vector.load %arg3[%c0_3, %c0_4] : memref<1x256xf32, #tpu.memory_space<vmem>>, vector<1x256xf32>
    %4 = vector.broadcast %3 : vector<1x256xf32> to vector<8x256xf32>
    %5 = arith.addf %2, %4 : vector<8x256xf32>
    %cst_5 = arith.constant 0.000000e+00 : f32
    %6 = vector.broadcast %cst_5 : f32 to vector<8x256xf32>
    %7 = arith.maximumf %5, %6 : vector<8x256xf32>
    %8 = arith.truncf %7 : vector<8x256xf32> to vector<8x256xbf16>
    %c0_6 = arith.constant 0 : index
    %c0_7 = arith.constant 0 : index
    %9 = vector.load %arg4[%c0_6, %c0_7] : memref<256x512xbf16, #tpu.memory_space<vmem>>, vector<256x512xbf16>
    %cst_8 = arith.constant dense<0.000000e+00> : vector<8x512xf32>
    %10 = tpu.matmul %8, %9, %cst_8 {dimension_numbers = #tpu.dot_dimension_numbers<[1], [0], [0], [1], [0, 0, 1, 1], [], []>} : vector<8x256xbf16>, vector<256x512xbf16>, vector<8x512xf32> -> vector<8x512xf32>
    %c0_9 = arith.constant 0 : index
    %c0_10 = arith.constant 0 : index
    %11 = vector.load %arg5[%c0_9, %c0_10] : memref<1x512xf32, #tpu.memory_space<vmem>>, vector<1x512xf32>
    %12 = vector.broadcast %11 : vector<1x512xf32> to vector<8x512xf32>
    %13 = arith.addf %10, %12 : vector<8x512xf32>
    %cst_11 = arith.constant 0.000000e+00 : f32
    %14 = vector.broadcast %cst_11 : f32 to vector<8x512xf32>
    %15 = arith.maximumf %13, %14 : vector<8x512xf32>
    %16 = arith.truncf %15 : vector<8x512xf32> to vector<8x512xbf16>
    %c0_12 = arith.constant 0 : index
    %c0_13 = arith.constant 0 : index
    %17 = vector.load %arg6[%c0_12, %c0_13] : memref<512x256xbf16, #tpu.memory_space<vmem>>, vector<512x256xbf16>
    %cst_14 = arith.constant dense<0.000000e+00> : vector<8x256xf32>
    %18 = tpu.matmul %16, %17, %cst_14 {dimension_numbers = #tpu.dot_dimension_numbers<[1], [0], [0], [1], [0, 0, 1, 1], [], []>} : vector<8x512xbf16>, vector<512x256xbf16>, vector<8x256xf32> -> vector<8x256xf32>
    %c0_15 = arith.constant 0 : index
    %c0_16 = arith.constant 0 : index
    %19 = vector.load %arg7[%c0_15, %c0_16] : memref<1x256xf32, #tpu.memory_space<vmem>>, vector<1x256xf32>
    %20 = vector.broadcast %19 : vector<1x256xf32> to vector<8x256xf32>
    %21 = arith.addf %18, %20 : vector<8x256xf32>
    %cst_17 = arith.constant 0.000000e+00 : f32
    %22 = vector.broadcast %cst_17 : f32 to vector<8x256xf32>
    %23 = arith.maximumf %21, %22 : vector<8x256xf32>
    %24 = arith.truncf %23 : vector<8x256xf32> to vector<8x256xbf16>
    %c0_18 = arith.constant 0 : index
    %c0_19 = arith.constant 0 : index
    %25 = vector.load %arg8[%c0_18, %c0_19] : memref<256x128xbf16, #tpu.memory_space<vmem>>, vector<256x128xbf16>
    %cst_20 = arith.constant dense<0.000000e+00> : vector<8x128xf32>
    %26 = tpu.matmul %24, %25, %cst_20 {dimension_numbers = #tpu.dot_dimension_numbers<[1], [0], [0], [1], [0, 0, 1, 1], [], []>} : vector<8x256xbf16>, vector<256x128xbf16>, vector<8x128xf32> -> vector<8x128xf32>
    %c0_21 = arith.constant 0 : index
    %c0_22 = arith.constant 0 : index
    %27 = vector.load %arg9[%c0_21, %c0_22] : memref<1x128xf32, #tpu.memory_space<vmem>>, vector<1x128xf32>
    %28 = vector.broadcast %27 : vector<1x128xf32> to vector<8x128xf32>
    %29 = arith.addf %26, %28 : vector<8x128xf32>
    %c0_23 = arith.constant 0 : index
    %c0_24 = arith.constant 0 : index
    %30 = vector.load %arg10[%c0_23, %c0_24] : memref<8x128xf32, #tpu.memory_space<vmem>>, vector<8x128xf32>
    tpu.vector_store %arg10[%c0_23, %c0_24], %29 {strides = array<i32>} : memref<8x128xf32, #tpu.memory_space<vmem>>, vector<8x128xf32>,
    return
  }
  func.func @transform_0(%arg0: i32) -> (i32, i32) {
    %c0_i32 = arith.constant 0 : i32
    %c0_i32_0 = arith.constant 0 : i32
    return %arg0, %c0_i32 : i32, i32
  }
  func.func @transform_1(%arg0: i32) -> (i32, i32) {
    %c0_i32 = arith.constant 0 : i32
    %c0_i32_0 = arith.constant 0 : i32
    %c0_i32_1 = arith.constant 0 : i32
    return %c0_i32, %c0_i32_0 : i32, i32
  }
  func.func @transform_2(%arg0: i32) -> (i32, i32) {
    %c0_i32 = arith.constant 0 : i32
    %c0_i32_0 = arith.constant 0 : i32
    %c0_i32_1 = arith.constant 0 : i32
    return %c0_i32, %c0_i32_0 : i32, i32
  }
  func.func @transform_3(%arg0: i32) -> (i32, i32) {
    %c0_i32 = arith.constant 0 : i32
    %c0_i32_0 = arith.constant 0 : i32
    %c0_i32_1 = arith.constant 0 : i32
    return %c0_i32, %c0_i32_0 : i32, i32
  }
  func.func @transform_4(%arg0: i32) -> (i32, i32) {
    %c0_i32 = arith.constant 0 : i32
    %c0_i32_0 = arith.constant 0 : i32
    %c0_i32_1 = arith.constant 0 : i32
    return %c0_i32, %c0_i32_0 : i32, i32
  }
  func.func @transform_5(%arg0: i32) -> (i32, i32) {
    %c0_i32 = arith.constant 0 : i32
    %c0_i32_0 = arith.constant 0 : i32
    %c0_i32_1 = arith.constant 0 : i32
    return %c0_i32, %c0_i32_0 : i32, i32
  }
  func.func @transform_6(%arg0: i32) -> (i32, i32) {
    %c0_i32 = arith.constant 0 : i32
    %c0_i32_0 = arith.constant 0 : i32
    %c0_i32_1 = arith.constant 0 : i32
    return %c0_i32, %c0_i32_0 : i32, i32
  }
  func.func @transform_7(%arg0: i32) -> (i32, i32) {
    %c0_i32 = arith.constant 0 : i32
    %c0_i32_0 = arith.constant 0 : i32
    %c0_i32_1 = arith.constant 0 : i32
    return %c0_i32, %c0_i32_0 : i32, i32
  }
  func.func @transform_8(%arg0: i32) -> (i32, i32) {
    %c0_i32 = arith.constant 0 : i32
    %c0_i32_0 = arith.constant 0 : i32
    %c0_i32_1 = arith.constant 0 : i32
    return %c0_i32, %c0_i32_0 : i32, i32
  }
  func.func @transform_9(%arg0: i32) -> (i32, i32) {
    %c0_i32 = arith.constant 0 : i32
    %c0_i32_0 = arith.constant 0 : i32
    return %arg0, %c0_i32 : i32, i32
  }
}

</mosaic_0001>

<llo_original>
// kernel: tpu_custom_call.1
$region0: #{tpu_custom_call.1}
  #allocation0 [shape = 'u32[]', space=smem, size = 0x4, offset = 0x4, fixed_abs, tag = 'smem constant byte address 0x4 - core index']
  #allocation1 [shape = 'u32[144,128]{1,0:T(1,128)}', space=vmem, size = 0x12000, scoped, tag = 'internal scratch']
  %s0 = inlined_call_operand.hbm [shape: bf16[8,16], index: 0, kind: input, shape index: {}]
  %s1 = inlined_call_operand.hbm [shape: bf16[16,256], index: 1, kind: input, shape index: {}]
  %s2 = inlined_call_operand.vmem [shape: f32[1,256], index: 2, kind: input, shape index: {}]
  %s3 = inlined_call_operand.hbm [shape: bf16[256,512], index: 3, kind: input, shape index: {}]
  %s4 = inlined_call_operand.vmem [shape: f32[1,512], index: 4, kind: input, shape index: {}]
  %s5 = inlined_call_operand.hbm [shape: bf16[512,256], index: 5, kind: input, shape index: {}]
  %s6 = inlined_call_operand.vmem [shape: f32[1,256], index: 6, kind: input, shape index: {}]
  %s7 = inlined_call_operand.hbm [shape: bf16[256,128], index: 7, kind: input, shape index: {}]
  %s8 = inlined_call_operand.vmem [shape: f32[1,128], index: 8, kind: input, shape index: {}]
  %s9 = inlined_call_operand.hbm [shape: f32[8,128], index: 9, kind: output, shape index: {}]
  %s10 = sld [smem:[#allocation0]]
  $region66: #{tpu_custom_call.1} parent=0
    _
  %s12 = ssub.s32 1, %s10
  %s13 = scalar_select 0, %s12, %s10
  $region1: #{tpu_custom_call.1} parent=0
    #allocation2 [shape = 'u8[2048]{0}', space=vmem, size = 0x800, scoped, tag = 'input window, operand 0, single buffered']
    #allocation3 [shape = 's32[1]{0}', space=sflag, size = 0x4, scoped, tag = 'scoped memory for tpu_custom_call.1']
    #allocation4 [shape = 's32[1]{0}', space=sflag, size = 0x4, scoped, tag = 'scoped memory for tpu_custom_call.1']
    #allocation5 [shape = 'u8[8192]{0}', space=vmem, size = 0x2000, scoped, tag = 'input window, operand 1, single buffered']
    #allocation6 [shape = 's32[1]{0}', space=sflag, size = 0x4, scoped, tag = 'scoped memory for tpu_custom_call.1']
    #allocation7 [shape = 'u8[262144]{0}', space=vmem, size = 0x40000, scoped, tag = 'input window, operand 3, single buffered']
    #allocation8 [shape = 'u8[262144]{0}', space=vmem, size = 0x40000, scoped, tag = 'input window, operand 5, single buffered']
    #allocation9 [shape = 's32[1]{0}', space=sflag, size = 0x4, scoped, tag = 'scoped memory for tpu_custom_call.1']
    #allocation10 [shape = 'u8[65536]{0}', space=vmem, size = 0x10000, scoped, tag = 'input window, operand 7, single buffered']
    #allocation11 [shape = 'u8[4096]{0}', space=vmem, size = 0x1000, scoped, tag = 'output window, operand 0, single buffered']
    %14 = vsyncpa [#allocation3], 0
    %15 = vsyncpa [#allocation6], 0
    %16 = vsyncpa [#allocation9], 0
    %17 = vsyncpa [#allocation4], 0
    // Predicated region
    $region2: #{tpu_custom_call.1} parent=1 // pred_check
      _
    $region3: #{tpu_custom_call.1} parent=1 // pred_check_branch
      %19 = sbr.rel (0) target = $region5
    $region4: #{tpu_custom_call.1} parent=1 // pred_region
      %s21 = ssub.s32 64, 64
      %22 = vsyncadd [#allocation3], %s21
      %s24 = sshll.u32 [#allocation2], 4
      %s25 = int_to_ptr.vmem [resolvable:$true] %s24
      %27 = dma.hbm_to_vmem [thread:$0]  %s0, 64, %s25, [#allocation3]
    $region5: #{tpu_custom_call.1} parent=1 // pred_fallthru
      _
    // Predicated region
    $region6: #{tpu_custom_call.1} parent=1 // pred_check
      _
    $region7: #{tpu_custom_call.1} parent=1 // pred_check_branch
      %29 = sbr.rel (0) target = $region9
    $region8: #{tpu_custom_call.1} parent=1 // pred_region
      %s31 = ssub.s32 256, 256
      %32 = vsyncadd [#allocation6], %s31
      %s33 = sshll.u32 [#allocation5], 4
      %s34 = int_to_ptr.vmem [resolvable:$true] %s33
      %39 = dma.hbm_to_vmem [thread:$0]  %s1, 256, %s34, [#allocation6], 128, 128, 8
    $region9: #{tpu_custom_call.1} parent=1 // pred_fallthru
      _
    // Predicated region
    $region10: #{tpu_custom_call.1} parent=1 // pred_check
      _
    $region11: #{tpu_custom_call.1} parent=1 // pred_check_branch
      %41 = sbr.rel (0) target = $region13
    $region12: #{tpu_custom_call.1} parent=1 // pred_region
      _
    $region13: #{tpu_custom_call.1} parent=1 // pred_fallthru
      _
    // Predicated region
    $region14: #{tpu_custom_call.1} parent=1 // pred_check
      _
    $region15: #{tpu_custom_call.1} parent=1 // pred_check_branch
      %43 = sbr.rel (0) target = $region17
    $region16: #{tpu_custom_call.1} parent=1 // pred_region
      %s45 = ssub.s32 8192, 8192
      %46 = vsyncadd [#allocation6], %s45
      %s47 = sshll.u32 [#allocation7], 4
      %s48 = int_to_ptr.vmem [resolvable:$true] %s47
      %53 = dma.hbm_to_vmem [thread:$0]  %s3, 8192, %s48, [#allocation6], 256, 256, 16
    $region17: #{tpu_custom_call.1} parent=1 // pred_fallthru
      _
    // Predicated region
    $region18: #{tpu_custom_call.1} parent=1 // pred_check
      _
    $region19: #{tpu_custom_call.1} parent=1 // pred_check_branch
      %55 = sbr.rel (0) target = $region21
    $region20: #{tpu_custom_call.1} parent=1 // pred_region
      _
    $region21: #{tpu_custom_call.1} parent=1 // pred_fallthru
      _
    // Predicated region
    $region22: #{tpu_custom_call.1} parent=1 // pred_check
      _
    $region23: #{tpu_custom_call.1} parent=1 // pred_check_branch
      %57 = sbr.rel (0) target = $region25
    $region24: #{tpu_custom_call.1} parent=1 // pred_region
      %s59 = ssub.s32 8192, 8192
      %60 = vsyncadd [#allocation9], %s59
      %s61 = sshll.u32 [#allocation8], 4
      %s62 = int_to_ptr.vmem [resolvable:$true] %s61
      %67 = dma.hbm_to_vmem [thread:$0]  %s5, 8192, %s62, [#allocation9], 128, 128, 8
    $region25: #{tpu_custom_call.1} parent=1 // pred_fallthru
      _
    // Predicated region
    $region26: #{tpu_custom_call.1} parent=1 // pred_check
      _
    $region27: #{tpu_custom_call.1} parent=1 // pred_check_branch
      %69 = sbr.rel (0) target = $region29
    $region28: #{tpu_custom_call.1} parent=1 // pred_region
      _
    $region29: #{tpu_custom_call.1} parent=1 // pred_fallthru
      _
    // Predicated region
    $region30: #{tpu_custom_call.1} parent=1 // pred_check
      _
    $region31: #{tpu_custom_call.1} parent=1 // pred_check_branch
      %71 = sbr.rel (0) target = $region33
    $region32: #{tpu_custom_call.1} parent=1 // pred_region
      %s73 = ssub.s32 2048, 2048
      %74 = vsyncadd [#allocation9], %s73
      %s75 = sshll.u32 [#allocation10], 4
      %s76 = int_to_ptr.vmem [resolvable:$true] %s75
      %81 = dma.hbm_to_vmem [thread:$0]  %s7, 2048, %s76, [#allocation9], 64, 64, 4
    $region33: #{tpu_custom_call.1} parent=1 // pred_fallthru
      _
    // Predicated region
    $region34: #{tpu_custom_call.1} parent=1 // pred_check
      _
    $region35: #{tpu_custom_call.1} parent=1 // pred_check_branch
      %83 = sbr.rel (0) target = $region37
    $region36: #{tpu_custom_call.1} parent=1 // pred_region
      _
    $region37: #{tpu_custom_call.1} parent=1 // pred_fallthru
      _
    // Predicated region
    $region38: #{tpu_custom_call.1} parent=1 // pred_check
      _
    $region39: #{tpu_custom_call.1} parent=1 // pred_check_branch
      %85 = sbr.rel (0) target = $region41
    $region40: #{tpu_custom_call.1} parent=1 // pred_region
      %86 = dma.done [#allocation3], 64
    $region41: #{tpu_custom_call.1} parent=1 // pred_fallthru
      _
    // Predicated region
    $region42: #{tpu_custom_call.1} parent=1 // pred_check
      _
    $region43: #{tpu_custom_call.1} parent=1 // pred_check_branch
      %88 = sbr.rel (0) target = $region45
    $region44: #{tpu_custom_call.1} parent=1 // pred_region
      %89 = dma.done [#allocation6], 256
    $region45: #{tpu_custom_call.1} parent=1 // pred_fallthru
      _
    // Predicated region
    $region46: #{tpu_custom_call.1} parent=1 // pred_check
      _
    $region47: #{tpu_custom_call.1} parent=1 // pred_check_branch
      %91 = sbr.rel (0) target = $region49
    $region48: #{tpu_custom_call.1} parent=1 // pred_region
      %92 = dma.done [#allocation6], 8192
    $region49: #{tpu_custom_call.1} parent=1 // pred_fallthru
      _
    // Predicated region
    $region50: #{tpu_custom_call.1} parent=1 // pred_check
      _
    $region51: #{tpu_custom_call.1} parent=1 // pred_check_branch
      %94 = sbr.rel (0) target = $region53
    $region52: #{tpu_custom_call.1} parent=1 // pred_region
      %95 = dma.done [#allocation9], 8192
    $region53: #{tpu_custom_call.1} parent=1 // pred_fallthru
      _
    // Predicated region
    $region54: #{tpu_custom_call.1} parent=1 // pred_check
      _
    $region55: #{tpu_custom_call.1} parent=1 // pred_check_branch
      %97 = sbr.rel (0) target = $region57
    $region56: #{tpu_custom_call.1} parent=1 // pred_region
      %98 = dma.done [#allocation9], 2048
    $region57: #{tpu_custom_call.1} parent=1 // pred_fallthru
      _
    %v100 = vld [vmem:[#allocation2] sm:$0xf]
    %v101 = vld [vmem:[#allocation5] sm:$0xff]
    %v102 = vld [vmem:[#allocation5 + $0x8] sm:$0xff]
    %v103 = vld [vmem:[%s2] sm:$0x3]
    %v105 = vlaneseq
    %v106 = vshrl.u32 %v105, 7
    %v107 = vsub.s32 0, %v106
    %v108 = vrot.slane %v103, %v107
    %v109 = vlaneseq
    %v110 = vshrl.u32 %v109, 7
    %v111 = vsub.s32 1, %v110
    %v112 = vrot.slane %v103, %v111
    %v117 = vunpack.c.l.b16 %v101
    %v118 = vunpack.c.h.b16 %v101
    %v119 = vunpack.c.l.b16 %v102
    %v120 = vunpack.c.h.b16 %v102
    %v121 = vpack.c.b16 %v119, %v117
    %v122 = vpack.c.b16 %v120, %v118
    %vm125 = vcmask 130048
    %v127 = vsel %vm125, %v100, 0
    %129 = vmatprep.subr.bf16.mxu0 %v122
    %130 = vmatpush1.bf16.msra.mxu0 %v121
    %131 = vmatprep.subr.bf16.mxu0 0
    %132 = vmatpush1.bf16.msra.mxu0 0
    %133 = vmatprep.subr.bf16.mxu0 0
    %134 = vmatpush1.bf16.msra.mxu0 0
    %135 = vmatprep.subr.bf16.mxu0 0
    %136 = vmatpush1.bf16.msra.mxu0 0
    %137 = vmatprep.subr.bf16.mxu0 0
    %138 = vmatpush1.bf16.msra.mxu0 0
    %139 = vmatprep.subr.bf16.mxu0 0
    %140 = vmatpush1.bf16.msra.mxu0 0
    %141 = vmatprep.subr.bf16.mxu0 0
    %142 = vmatpush1.bf16.msra.mxu0 0
    %143 = vmatprep.subr.bf16.mxu0 0
    %144 = vmatpush1.bf16.msra.mxu0 0
    %145 = vmatprep.subr.bf16.mxu0 0
    %146 = vmatpush1.bf16.msra.mxu0 0
    %147 = vmatprep.subr.bf16.mxu0 0
    %148 = vmatpush1.bf16.msra.mxu0 0
    %149 = vmatprep.subr.bf16.mxu0 0
    %150 = vmatpush1.bf16.msra.mxu0 0
    %151 = vmatprep.subr.bf16.mxu0 0
    %152 = vmatpush1.bf16.msra.mxu0 0
    %153 = vmatprep.subr.bf16.mxu0 0
    %154 = vmatpush1.bf16.msra.mxu0 0
    %155 = vmatprep.subr.bf16.mxu0 0
    %156 = vmatpush1.bf16.msra.mxu0 0
    %157 = vmatprep.subr.bf16.mxu0 0
    %158 = vmatpush1.bf16.msra.mxu0 0
    %159 = vmatprep.subr.bf16.mxu0 0
    %160 = vmatpush1.bf16.msra.mxu0 0
    %161 = vmatprep.mubr.bf16.mxu0 0
    %162 = vmatmul.mubr.bf16.gmra.mrb[0].mxu0 %v127
    %v163 = vpop.f32.mrb[0].mxu0
    %v164 = vadd.f32 %v108, %v163
    %v165 = vpop.f32.mrb[0].mxu0
    %v166 = vadd.f32 %v112, %v165
    %v167 = vpop.f32.mrb[0].mxu0
    %v168 = vpop.f32.mrb[0].mxu0
    %169 = vdwg.mxu0
    %v170 = vmax.f32 %v164, 0.0
    %v171 = vmax.f32 %v166, 0.0
    %v172 = vpack.c.bf16 %v170, %v170
    %v173 = vpack.c.bf16 %v171, %v171
    %v174 = vld [vmem:[#allocation7] sm:$0xff]
    %v175 = vld [vmem:[#allocation7 + $0x8] sm:$0xff]
    %v176 = vld [vmem:[#allocation7 + $0x10] sm:$0xff]
    %v177 = vld [vmem:[#allocation7 + $0x18] sm:$0xff]
    %v178 = vld [vmem:[#allocation7 + $0x20] sm:$0xff]
    %v179 = vld [vmem:[#allocation7 + $0x28] sm:$0xff]
    %v180 = vld [vmem:[#allocation7 + $0x30] sm:$0xff]
    %v181 = vld [vmem:[#allocation7 + $0x38] sm:$0xff]
    %v182 = vld [vmem:[#allocation7 + $0x40] sm:$0xff]
    %v183 = vld [vmem:[#allocation7 + $0x48] sm:$0xff]
    %v184 = vld [vmem:[#allocation7 + $0x50] sm:$0xff]
    %v185 = vld [vmem:[#allocation7 + $0x58] sm:$0xff]
    %v186 = vld [vmem:[#allocation7 + $0x60] sm:$0xff]
    %v187 = vld [vmem:[#allocation7 + $0x68] sm:$0xff]
    %v188 = vld [vmem:[#allocation7 + $0x70] sm:$0xff]
    %v189 = vld [vmem:[#allocation7 + $0x78] sm:$0xff]
    %v190 = vld [vmem:[#allocation7 + $0x80] sm:$0xff]
    %v191 = vld [vmem:[#allocation7 + $0x88] sm:$0xff]
    %v192 = vld [vmem:[#allocation7 + $0x90] sm:$0xff]
    %v193 = vld [vmem:[#allocation7 + $0x98] sm:$0xff]
    %v194 = vld [vmem:[#allocation7 + $0xa0] sm:$0xff]
    %v195 = vld [vmem:[#allocation7 + $0xa8] sm:$0xff]
    %v196 = vld [vmem:[#allocation7 + $0xb0] sm:$0xff]
    %v197 = vld [vmem:[#allocation7 + $0xb8] sm:$0xff]
    %v198 = vld [vmem:[#allocation7 + $0xc0] sm:$0xff]
    %v199 = vld [vmem:[#allocation7 + $0xc8] sm:$0xff]
    %v200 = vld [vmem:[#allocation7 + $0xd0] sm:$0xff]
    %v201 = vld [vmem:[#allocation7 + $0xd8] sm:$0xff]
    %v202 = vld [vmem:[#allocation7 + $0xe0] sm:$0xff]
    %v203 = vld [vmem:[#allocation7 + $0xe8] sm:$0xff]
    %v204 = vld [vmem:[#allocation7 + $0xf0] sm:$0xff]
    %v205 = vld [vmem:[#allocation7 + $0xf8] sm:$0xff]
    %v206 = vld [vmem:[#allocation7 + $0x100] sm:$0xff]
    %v207 = vld [vmem:[#allocation7 + $0x108] sm:$0xff]
    %v208 = vld [vmem:[#allocation7 + $0x110] sm:$0xff]
    %v209 = vld [vmem:[#allocation7 + $0x118] sm:$0xff]
    %v210 = vld [vmem:[#allocation7 + $0x120] sm:$0xff]
    %v211 = vld [vmem:[#allocation7 + $0x128] sm:$0xff]
    %v212 = vld [vmem:[#allocation7 + $0x130] sm:$0xff]
    %v213 = vld [vmem:[#allocation7 + $0x138] sm:$0xff]
    %v214 = vld [vmem:[#allocation7 + $0x140] sm:$0xff]
    %v215 = vld [vmem:[#allocation7 + $0x148] sm:$0xff]
    %v216 = vld [vmem:[#allocation7 + $0x150] sm:$0xff]
    %v217 = vld [vmem:[#allocation7 + $0x158] sm:$0xff]
    %v218 = vld [vmem:[#allocation7 + $0x160] sm:$0xff]
    %v219 = vld [vmem:[#allocation7 + $0x168] sm:$0xff]
    %v220 = vld [vmem:[#allocation7 + $0x170] sm:$0xff]
    %v221 = vld [vmem:[#allocation7 + $0x178] sm:$0xff]
    %v222 = vld [vmem:[#allocation7 + $0x180] sm:$0xff]
    %v223 = vld [vmem:[#allocation7 + $0x188] sm:$0xff]
    %v224 = vld [vmem:[#allocation7 + $0x190] sm:$0xff]
    %v225 = vld [vmem:[#allocation7 + $0x198] sm:$0xff]
    %v226 = vld [vmem:[#allocation7 + $0x1a0] sm:$0xff]
    %v227 = vld [vmem:[#allocation7 + $0x1a8] sm:$0xff]
    %v228 = vld [vmem:[#allocation7 + $0x1b0] sm:$0xff]
    %v229 = vld [vmem:[#allocation7 + $0x1b8] sm:$0xff]
    %v230 = vld [vmem:[#allocation7 + $0x1c0] sm:$0xff]
    %v231 = vld [vmem:[#allocation7 + $0x1c8] sm:$0xff]
    %v232 = vld [vmem:[#allocation7 + $0x1d0] sm:$0xff]
    %v233 = vld [vmem:[#allocation7 + $0x1d8] sm:$0xff]
    %v234 = vld [vmem:[#allocation7 + $0x1e0] sm:$0xff]
    %v235 = vld [vmem:[#allocation7 + $0x1e8] sm:$0xff]
    %v236 = vld [vmem:[#allocation7 + $0x1f0] sm:$0xff]
    %v237 = vld [vmem:[#allocation7 + $0x1f8] sm:$0xff]
    %v238 = vld [vmem:[%s4] sm:$0xf]
    %v240 = vlaneseq
    %v241 = vshrl.u32 %v240, 7
    %v242 = vsub.s32 0, %v241
    %v243 = vrot.slane %v238, %v242
    %v244 = vlaneseq
    %v245 = vshrl.u32 %v244, 7
    %v246 = vsub.s32 1, %v245
    %v247 = vrot.slane %v238, %v246
    %v248 = vlaneseq
    %v249 = vshrl.u32 %v248, 7
    %v250 = vsub.s32 2, %v249
    %v251 = vrot.slane %v238, %v250
    %v252 = vlaneseq
    %v253 = vshrl.u32 %v252, 7
    %v254 = vsub.s32 3, %v253
    %v255 = vrot.slane %v238, %v254
    %v324 = vunpack.c.l.b16 %v174
    %v325 = vunpack.c.h.b16 %v174
    %v326 = vunpack.c.l.b16 %v175
    %v327 = vunpack.c.h.b16 %v175
    %v328 = vunpack.c.l.b16 %v176
    %v329 = vunpack.c.h.b16 %v176
    %v330 = vunpack.c.l.b16 %v177
    %v331 = vunpack.c.h.b16 %v177
    %v332 = vunpack.c.l.b16 %v178
    %v333 = vunpack.c.h.b16 %v178
    %v334 = vunpack.c.l.b16 %v179
    %v335 = vunpack.c.h.b16 %v179
    %v336 = vunpack.c.l.b16 %v180
    %v337 = vunpack.c.h.b16 %v180
    %v338 = vunpack.c.l.b16 %v181
    %v339 = vunpack.c.h.b16 %v181
    %v340 = vunpack.c.l.b16 %v182
    %v341 = vunpack.c.h.b16 %v182
    %v342 = vunpack.c.l.b16 %v183
    %v343 = vunpack.c.h.b16 %v183
    %v344 = vunpack.c.l.b16 %v184
    %v345 = vunpack.c.h.b16 %v184
    %v346 = vunpack.c.l.b16 %v185
    %v347 = vunpack.c.h.b16 %v185
    %v348 = vunpack.c.l.b16 %v186
    %v349 = vunpack.c.h.b16 %v186
    %v350 = vunpack.c.l.b16 %v187
    %v351 = vunpack.c.h.b16 %v187
    %v352 = vunpack.c.l.b16 %v188
    %v353 = vunpack.c.h.b16 %v188
    %v354 = vunpack.c.l.b16 %v189
    %v355 = vunpack.c.h.b16 %v189
    %v356 = vunpack.c.l.b16 %v190
    %v357 = vunpack.c.h.b16 %v190
    %v358 = vunpack.c.l.b16 %v191
    %v359 = vunpack.c.h.b16 %v191
    %v360 = vunpack.c.l.b16 %v192
    %v361 = vunpack.c.h.b16 %v192
    %v362 = vunpack.c.l.b16 %v193
    %v363 = vunpack.c.h.b16 %v193
    %v364 = vunpack.c.l.b16 %v194
    %v365 = vunpack.c.h.b16 %v194
    %v366 = vunpack.c.l.b16 %v195
    %v367 = vunpack.c.h.b16 %v195
    %v368 = vunpack.c.l.b16 %v196
    %v369 = vunpack.c.h.b16 %v196
    %v370 = vunpack.c.l.b16 %v197
    %v371 = vunpack.c.h.b16 %v197
    %v372 = vunpack.c.l.b16 %v198
    %v373 = vunpack.c.h.b16 %v198
    %v374 = vunpack.c.l.b16 %v199
    %v375 = vunpack.c.h.b16 %v199
    %v376 = vunpack.c.l.b16 %v200
    %v377 = vunpack.c.h.b16 %v200
    %v378 = vunpack.c.l.b16 %v201
    %v379 = vunpack.c.h.b16 %v201
    %v380 = vunpack.c.l.b16 %v202
    %v381 = vunpack.c.h.b16 %v202
    %v382 = vunpack.c.l.b16 %v203
    %v383 = vunpack.c.h.b16 %v203
    %v384 = vunpack.c.l.b16 %v204
    %v385 = vunpack.c.h.b16 %v204
    %v386 = vunpack.c.l.b16 %v205
    %v387 = vunpack.c.h.b16 %v205
    %v388 = vunpack.c.l.b16 %v206
    %v389 = vunpack.c.h.b16 %v206
    %v390 = vunpack.c.l.b16 %v207
    %v391 = vunpack.c.h.b16 %v207
    %v392 = vunpack.c.l.b16 %v208
    %v393 = vunpack.c.h.b16 %v208
    %v394 = vunpack.c.l.b16 %v209
    %v395 = vunpack.c.h.b16 %v209
    %v396 = vunpack.c.l.b16 %v210
    %v397 = vunpack.c.h.b16 %v210
    %v398 = vunpack.c.l.b16 %v211
    %v399 = vunpack.c.h.b16 %v211
    %v400 = vunpack.c.l.b16 %v212
    %v401 = vunpack.c.h.b16 %v212
    %v402 = vunpack.c.l.b16 %v213
    %v403 = vunpack.c.h.b16 %v213
    %v404 = vunpack.c.l.b16 %v214
    %v405 = vunpack.c.h.b16 %v214
    %v406 = vunpack.c.l.b16 %v215
    %v407 = vunpack.c.h.b16 %v215
    %v408 = vunpack.c.l.b16 %v216
    %v409 = vunpack.c.h.b16 %v216
    %v410 = vunpack.c.l.b16 %v217
    %v411 = vunpack.c.h.b16 %v217
    %v412 = vunpack.c.l.b16 %v218
    %v413 = vunpack.c.h.b16 %v218
    %v414 = vunpack.c.l.b16 %v219
    %v415 = vunpack.c.h.b16 %v219
    %v416 = vunpack.c.l.b16 %v220
    %v417 = vunpack.c.h.b16 %v220
    %v418 = vunpack.c.l.b16 %v221
    %v419 = vunpack.c.h.b16 %v221
    %v420 = vunpack.c.l.b16 %v222
    %v421 = vunpack.c.h.b16 %v222
    %v422 = vunpack.c.l.b16 %v223
    %v423 = vunpack.c.h.b16 %v223
    %v424 = vunpack.c.l.b16 %v224
    %v425 = vunpack.c.h.b16 %v224
    %v426 = vunpack.c.l.b16 %v225
    %v427 = vunpack.c.h.b16 %v225
    %v428 = vunpack.c.l.b16 %v226
    %v429 = vunpack.c.h.b16 %v226
    %v430 = vunpack.c.l.b16 %v227
    %v431 = vunpack.c.h.b16 %v227
    %v432 = vunpack.c.l.b16 %v228
    %v433 = vunpack.c.h.b16 %v228
    %v434 = vunpack.c.l.b16 %v229
    %v435 = vunpack.c.h.b16 %v229
    %v436 = vunpack.c.l.b16 %v230
    %v437 = vunpack.c.h.b16 %v230
    %v438 = vunpack.c.l.b16 %v231
    %v439 = vunpack.c.h.b16 %v231
    %v440 = vunpack.c.l.b16 %v232
    %v441 = vunpack.c.h.b16 %v232
    %v442 = vunpack.c.l.b16 %v233
    %v443 = vunpack.c.h.b16 %v233
    %v444 = vunpack.c.l.b16 %v234
    %v445 = vunpack.c.h.b16 %v234
    %v446 = vunpack.c.l.b16 %v235
    %v447 = vunpack.c.h.b16 %v235
    %v448 = vunpack.c.l.b16 %v236
    %v449 = vunpack.c.h.b16 %v236
    %v450 = vunpack.c.l.b16 %v237
    %v451 = vunpack.c.h.b16 %v237
    %v452 = vpack.c.b16 %v328, %v324
    %v453 = vpack.c.b16 %v329, %v325
    %v454 = vpack.c.b16 %v330, %v326
    %v455 = vpack.c.b16 %v331, %v327
    %v456 = vpack.c.b16 %v336, %v332
    %v457 = vpack.c.b16 %v337, %v333
    %v458 = vpack.c.b16 %v338, %v334
    %v459 = vpack.c.b16 %v339, %v335
    %v460 = vpack.c.b16 %v344, %v340
    %v461 = vpack.c.b16 %v345, %v341
    %v462 = vpack.c.b16 %v346, %v342
    %v463 = vpack.c.b16 %v347, %v343
    %v464 = vpack.c.b16 %v352, %v348
    %v465 = vpack.c.b16 %v353, %v349
    %v466 = vpack.c.b16 %v354, %v350
    %v467 = vpack.c.b16 %v355, %v351
    %v468 = vpack.c.b16 %v360, %v356
    %v469 = vpack.c.b16 %v361, %v357
    %v470 = vpack.c.b16 %v362, %v358
    %v471 = vpack.c.b16 %v363, %v359
    %v472 = vpack.c.b16 %v368, %v364
    %v473 = vpack.c.b16 %v369, %v365
    %v474 = vpack.c.b16 %v370, %v366
    %v475 = vpack.c.b16 %v371, %v367
    %v476 = vpack.c.b16 %v376, %v372
    %v477 = vpack.c.b16 %v377, %v373
    %v478 = vpack.c.b16 %v378, %v374
    %v479 = vpack.c.b16 %v379, %v375
    %v480 = vpack.c.b16 %v384, %v380
    %v481 = vpack.c.b16 %v385, %v381
    %v482 = vpack.c.b16 %v386, %v382
    %v483 = vpack.c.b16 %v387, %v383
    %v484 = vpack.c.b16 %v392, %v388
    %v485 = vpack.c.b16 %v393, %v389
    %v486 = vpack.c.b16 %v394, %v390
    %v487 = vpack.c.b16 %v395, %v391
    %v488 = vpack.c.b16 %v400, %v396
    %v489 = vpack.c.b16 %v401, %v397
    %v490 = vpack.c.b16 %v402, %v398
    %v491 = vpack.c.b16 %v403, %v399
    %v492 = vpack.c.b16 %v408, %v404
    %v493 = vpack.c.b16 %v409, %v405
    %v494 = vpack.c.b16 %v410, %v406
    %v495 = vpack.c.b16 %v411, %v407
    %v496 = vpack.c.b16 %v416, %v412
    %v497 = vpack.c.b16 %v417, %v413
    %v498 = vpack.c.b16 %v418, %v414
    %v499 = vpack.c.b16 %v419, %v415
    %v500 = vpack.c.b16 %v424, %v420
    %v501 = vpack.c.b16 %v425, %v421
    %v502 = vpack.c.b16 %v426, %v422
    %v503 = vpack.c.b16 %v427, %v423
    %v504 = vpack.c.b16 %v432, %v428
    %v505 = vpack.c.b16 %v433, %v429
    %v506 = vpack.c.b16 %v434, %v430
    %v507 = vpack.c.b16 %v435, %v431
    %v508 = vpack.c.b16 %v440, %v436
    %v509 = vpack.c.b16 %v441, %v437
    %v510 = vpack.c.b16 %v442, %v438
    %v511 = vpack.c.b16 %v443, %v439
    %v512 = vpack.c.b16 %v448, %v444
    %v513 = vpack.c.b16 %v449, %v445
    %v514 = vpack.c.b16 %v450, %v446
    %v515 = vpack.c.b16 %v451, %v447
    %580 = vmatprep.subr.bf16.mxu0 %v453
    %581 = vmatpush1.bf16.msra.mxu0 %v452
    %582 = vmatprep.subr.bf16.mxu0 %v457
    %583 = vmatpush1.bf16.msra.mxu0 %v456
    %584 = vmatprep.subr.bf16.mxu0 %v461
    %585 = vmatpush1.bf16.msra.mxu0 %v460
    %586 = vmatprep.subr.bf16.mxu0 %v465
    %587 = vmatpush1.bf16.msra.mxu0 %v464
    %588 = vmatprep.subr.bf16.mxu0 %v469
    %589 = vmatpush1.bf16.msra.mxu0 %v468
    %590 = vmatprep.subr.bf16.mxu0 %v473
    %591 = vmatpush1.bf16.msra.mxu0 %v472
    %592 = vmatprep.subr.bf16.mxu0 %v477
    %593 = vmatpush1.bf16.msra.mxu0 %v476
    %594 = vmatprep.subr.bf16.mxu0 %v481
    %595 = vmatpush1.bf16.msra.mxu0 %v480
    %596 = vmatprep.subr.bf16.mxu0 %v485
    %597 = vmatpush1.bf16.msra.mxu0 %v484
    %598 = vmatprep.subr.bf16.mxu0 %v489
    %599 = vmatpush1.bf16.msra.mxu0 %v488
    %600 = vmatprep.subr.bf16.mxu0 %v493
    %601 = vmatpush1.bf16.msra.mxu0 %v492
    %602 = vmatprep.subr.bf16.mxu0 %v497
    %603 = vmatpush1.bf16.msra.mxu0 %v496
    %604 = vmatprep.subr.bf16.mxu0 %v501
    %605 = vmatpush1.bf16.msra.mxu0 %v500
    %606 = vmatprep.subr.bf16.mxu0 %v505
    %607 = vmatpush1.bf16.msra.mxu0 %v504
    %608 = vmatprep.subr.bf16.mxu0 %v509
    %609 = vmatpush1.bf16.msra.mxu0 %v508
    %610 = vmatprep.subr.bf16.mxu0 %v513
    %611 = vmatpush1.bf16.msra.mxu0 %v512
    %612 = vmatprep.mubr.bf16.mxu0 %v173
    %613 = vmatmul.mubr.bf16.gmra.mrb[0].mxu0 %v172
    %v614 = vpop.f32.mrb[0].mxu0
    %v615 = vadd.f32 %v243, %v614
    %v616 = vpop.f32.mrb[0].mxu0
    %v617 = vadd.f32 %v247, %v616
    %v618 = vpop.f32.mrb[0].mxu0
    %v619 = vpop.f32.mrb[0].mxu0
    %620 = vdwg.mxu0
    %621 = vmatprep.subr.bf16.mxu0 %v455
    %622 = vmatpush1.bf16.msra.mxu0 %v454
    %623 = vmatprep.subr.bf16.mxu0 %v459
    %624 = vmatpush1.bf16.msra.mxu0 %v458
    %625 = vmatprep.subr.bf16.mxu0 %v463
    %626 = vmatpush1.bf16.msra.mxu0 %v462
    %627 = vmatprep.subr.bf16.mxu0 %v467
    %628 = vmatpush1.bf16.msra.mxu0 %v466
    %629 = vmatprep.subr.bf16.mxu0 %v471
    %630 = vmatpush1.bf16.msra.mxu0 %v470
    %631 = vmatprep.subr.bf16.mxu0 %v475
    %632 = vmatpush1.bf16.msra.mxu0 %v474
    %633 = vmatprep.subr.bf16.mxu0 %v479
    %634 = vmatpush1.bf16.msra.mxu0 %v478
    %635 = vmatprep.subr.bf16.mxu0 %v483
    %636 = vmatpush1.bf16.msra.mxu0 %v482
    %637 = vmatprep.subr.bf16.mxu0 %v487
    %638 = vmatpush1.bf16.msra.mxu0 %v486
    %639 = vmatprep.subr.bf16.mxu0 %v491
    %640 = vmatpush1.bf16.msra.mxu0 %v490
    %641 = vmatprep.subr.bf16.mxu0 %v495
    %642 = vmatpush1.bf16.msra.mxu0 %v494
    %643 = vmatprep.subr.bf16.mxu0 %v499
    %644 = vmatpush1.bf16.msra.mxu0 %v498
    %645 = vmatprep.subr.bf16.mxu0 %v503
    %646 = vmatpush1.bf16.msra.mxu0 %v502
    %647 = vmatprep.subr.bf16.mxu0 %v507
    %648 = vmatpush1.bf16.msra.mxu0 %v506
    %649 = vmatprep.subr.bf16.mxu0 %v511
    %650 = vmatpush1.bf16.msra.mxu0 %v510
    %651 = vmatprep.subr.bf16.mxu0 %v515
    %652 = vmatpush1.bf16.msra.mxu0 %v514
    %653 = vmatprep.mubr.bf16.mxu0 %v173
    %654 = vmatmul.mubr.bf16.gmra.mrb[0].mxu0 %v172
    %v655 = vpop.f32.mrb[0].mxu0
    %v656 = vadd.f32 %v251, %v655
    %v657 = vpop.f32.mrb[0].mxu0
    %v658 = vadd.f32 %v255, %v657
    %v659 = vpop.f32.mrb[0].mxu0
    %v660 = vpop.f32.mrb[0].mxu0
    %661 = vdwg.mxu0
    %v662 = vmax.f32 %v615, 0.0
    %v663 = vmax.f32 %v617, 0.0
    %v664 = vmax.f32 %v656, 0.0
    %v665 = vmax.f32 %v658, 0.0
    %v666 = vpack.c.bf16 %v662, %v662
    %v667 = vpack.c.bf16 %v663, %v663
    %v668 = vpack.c.bf16 %v664, %v664
    %v669 = vpack.c.bf16 %v665, %v665
    %v670 = vld [vmem:[#allocation8] sm:$0xff]
    %v671 = vld [vmem:[#allocation8 + $0x8] sm:$0xff]
    %v672 = vld [vmem:[#allocation8 + $0x10] sm:$0xff]
    %v673 = vld [vmem:[#allocation8 + $0x18] sm:$0xff]
    %v674 = vld [vmem:[#allocation8 + $0x20] sm:$0xff]
    %v675 = vld [vmem:[#allocation8 + $0x28] sm:$0xff]
    %v676 = vld [vmem:[#allocation8 + $0x30] sm:$0xff]
    %v677 = vld [vmem:[#allocation8 + $0x38] sm:$0xff]
    %v678 = vld [vmem:[#allocation8 + $0x40] sm:$0xff]
    %v679 = vld [vmem:[#allocation8 + $0x48] sm:$0xff]
    %v680 = vld [vmem:[#allocation8 + $0x50] sm:$0xff]
    %v681 = vld [vmem:[#allocation8 + $0x58] sm:$0xff]
    %v682 = vld [vmem:[#allocation8 + $0x60] sm:$0xff]
    %v683 = vld [vmem:[#allocation8 + $0x68] sm:$0xff]
    %v684 = vld [vmem:[#allocation8 + $0x70] sm:$0xff]
    %v685 = vld [vmem:[#allocation8 + $0x78] sm:$0xff]
    %v686 = vld [vmem:[#allocation8 + $0x80] sm:$0xff]
    %v687 = vld [vmem:[#allocation8 + $0x88] sm:$0xff]
    %v688 = vld [vmem:[#allocation8 + $0x90] sm:$0xff]
    %v689 = vld [vmem:[#allocation8 + $0x98] sm:$0xff]
    %v690 = vld [vmem:[#allocation8 + $0xa0] sm:$0xff]
    %v691 = vld [vmem:[#allocation8 + $0xa8] sm:$0xff]
    %v692 = vld [vmem:[#allocation8 + $0xb0] sm:$0xff]
    %v693 = vld [vmem:[#allocation8 + $0xb8] sm:$0xff]
    %v694 = vld [vmem:[#allocation8 + $0xc0] sm:$0xff]
    %v695 = vld [vmem:[#allocation8 + $0xc8] sm:$0xff]
    %v696 = vld [vmem:[#allocation8 + $0xd0] sm:$0xff]
    %v697 = vld [vmem:[#allocation8 + $0xd8] sm:$0xff]
    %v698 = vld [vmem:[#allocation8 + $0xe0] sm:$0xff]
    %v699 = vld [vmem:[#allocation8 + $0xe8] sm:$0xff]
    %v700 = vld [vmem:[#allocation8 + $0xf0] sm:$0xff]
    %v701 = vld [vmem:[#allocation8 + $0xf8] sm:$0xff]
    %v702 = vld [vmem:[#allocation8 + $0x100] sm:$0xff]
    %v703 = vld [vmem:[#allocation8 + $0x108] sm:$0xff]
    %v704 = vld [vmem:[#allocation8 + $0x110] sm:$0xff]
    %v705 = vld [vmem:[#allocation8 + $0x118] sm:$0xff]
    %v706 = vld [vmem:[#allocation8 + $0x120] sm:$0xff]
    %v707 = vld [vmem:[#allocation8 + $0x128] sm:$0xff]
    %v708 = vld [vmem:[#allocation8 + $0x130] sm:$0xff]
    %v709 = vld [vmem:[#allocation8 + $0x138] sm:$0xff]
    %v710 = vld [vmem:[#allocation8 + $0x140] sm:$0xff]
    %v711 = vld [vmem:[#allocation8 + $0x148] sm:$0xff]
    %v712 = vld [vmem:[#allocation8 + $0x150] sm:$0xff]
    %v713 = vld [vmem:[#allocation8 + $0x158] sm:$0xff]
    %v714 = vld [vmem:[#allocation8 + $0x160] sm:$0xff]
    %v715 = vld [vmem:[#allocation8 + $0x168] sm:$0xff]
    %v716 = vld [vmem:[#allocation8 + $0x170] sm:$0xff]
    %v717 = vld [vmem:[#allocation8 + $0x178] sm:$0xff]
    %v718 = vld [vmem:[#allocation8 + $0x180] sm:$0xff]
    %v719 = vld [vmem:[#allocation8 + $0x188] sm:$0xff]
    %v720 = vld [vmem:[#allocation8 + $0x190] sm:$0xff]
    %v721 = vld [vmem:[#allocation8 + $0x198] sm:$0xff]
    %v722 = vld [vmem:[#allocation8 + $0x1a0] sm:$0xff]
    %v723 = vld [vmem:[#allocation8 + $0x1a8] sm:$0xff]
    %v724 = vld [vmem:[#allocation8 + $0x1b0] sm:$0xff]
    %v725 = vld [vmem:[#allocation8 + $0x1b8] sm:$0xff]
    %v726 = vld [vmem:[#allocation8 + $0x1c0] sm:$0xff]
    %v727 = vld [vmem:[#allocation8 + $0x1c8] sm:$0xff]
    %v728 = vld [vmem:[#allocation8 + $0x1d0] sm:$0xff]
    %v729 = vld [vmem:[#allocation8 + $0x1d8] sm:$0xff]
    %v730 = vld [vmem:[#allocation8 + $0x1e0] sm:$0xff]
    %v731 = vld [vmem:[#allocation8 + $0x1e8] sm:$0xff]
    %v732 = vld [vmem:[#allocation8 + $0x1f0] sm:$0xff]
    %v733 = vld [vmem:[#allocation8 + $0x1f8] sm:$0xff]
    %v734 = vld [vmem:[%s6] sm:$0x3]
    %v736 = vlaneseq
    %v737 = vshrl.u32 %v736, 7
    %v738 = vsub.s32 0, %v737
    %v739 = vrot.slane %v734, %v738
    %v740 = vlaneseq
    %v741 = vshrl.u32 %v740, 7
    %v742 = vsub.s32 1, %v741
    %v743 = vrot.slane %v734, %v742
    %v810 = vunpack.c.l.b16 %v670
    %v811 = vunpack.c.h.b16 %v670
    %v812 = vunpack.c.l.b16 %v671
    %v813 = vunpack.c.h.b16 %v671
    %v814 = vunpack.c.l.b16 %v672
    %v815 = vunpack.c.h.b16 %v672
    %v816 = vunpack.c.l.b16 %v673
    %v817 = vunpack.c.h.b16 %v673
    %v818 = vunpack.c.l.b16 %v674
    %v819 = vunpack.c.h.b16 %v674
    %v820 = vunpack.c.l.b16 %v675
    %v821 = vunpack.c.h.b16 %v675
    %v822 = vunpack.c.l.b16 %v676
    %v823 = vunpack.c.h.b16 %v676
    %v824 = vunpack.c.l.b16 %v677
    %v825 = vunpack.c.h.b16 %v677
    %v826 = vunpack.c.l.b16 %v678
    %v827 = vunpack.c.h.b16 %v678
    %v828 = vunpack.c.l.b16 %v679
    %v829 = vunpack.c.h.b16 %v679
    %v830 = vunpack.c.l.b16 %v680
    %v831 = vunpack.c.h.b16 %v680
    %v832 = vunpack.c.l.b16 %v681
    %v833 = vunpack.c.h.b16 %v681
    %v834 = vunpack.c.l.b16 %v682
    %v835 = vunpack.c.h.b16 %v682
    %v836 = vunpack.c.l.b16 %v683
    %v837 = vunpack.c.h.b16 %v683
    %v838 = vunpack.c.l.b16 %v684
    %v839 = vunpack.c.h.b16 %v684
    %v840 = vunpack.c.l.b16 %v685
    %v841 = vunpack.c.h.b16 %v685
    %v842 = vunpack.c.l.b16 %v686
    %v843 = vunpack.c.h.b16 %v686
    %v844 = vunpack.c.l.b16 %v687
    %v845 = vunpack.c.h.b16 %v687
    %v846 = vunpack.c.l.b16 %v688
    %v847 = vunpack.c.h.b16 %v688
    %v848 = vunpack.c.l.b16 %v689
    %v849 = vunpack.c.h.b16 %v689
    %v850 = vunpack.c.l.b16 %v690
    %v851 = vunpack.c.h.b16 %v690
    %v852 = vunpack.c.l.b16 %v691
    %v853 = vunpack.c.h.b16 %v691
    %v854 = vunpack.c.l.b16 %v692
    %v855 = vunpack.c.h.b16 %v692
    %v856 = vunpack.c.l.b16 %v693
    %v857 = vunpack.c.h.b16 %v693
    %v858 = vunpack.c.l.b16 %v694
    %v859 = vunpack.c.h.b16 %v694
    %v860 = vunpack.c.l.b16 %v695
    %v861 = vunpack.c.h.b16 %v695
    %v862 = vunpack.c.l.b16 %v696
    %v863 = vunpack.c.h.b16 %v696
    %v864 = vunpack.c.l.b16 %v697
    %v865 = vunpack.c.h.b16 %v697
    %v866 = vunpack.c.l.b16 %v698
    %v867 = vunpack.c.h.b16 %v698
    %v868 = vunpack.c.l.b16 %v699
    %v869 = vunpack.c.h.b16 %v699
    %v870 = vunpack.c.l.b16 %v700
    %v871 = vunpack.c.h.b16 %v700
    %v872 = vunpack.c.l.b16 %v701
    %v873 = vunpack.c.h.b16 %v701
    %v874 = vunpack.c.l.b16 %v702
    %v875 = vunpack.c.h.b16 %v702
    %v876 = vunpack.c.l.b16 %v703
    %v877 = vunpack.c.h.b16 %v703
    %v878 = vunpack.c.l.b16 %v704
    %v879 = vunpack.c.h.b16 %v704
    %v880 = vunpack.c.l.b16 %v705
    %v881 = vunpack.c.h.b16 %v705
    %v882 = vunpack.c.l.b16 %v706
    %v883 = vunpack.c.h.b16 %v706
    %v884 = vunpack.c.l.b16 %v707
    %v885 = vunpack.c.h.b16 %v707
    %v886 = vunpack.c.l.b16 %v708
    %v887 = vunpack.c.h.b16 %v708
    %v888 = vunpack.c.l.b16 %v709
    %v889 = vunpack.c.h.b16 %v709
    %v890 = vunpack.c.l.b16 %v710
    %v891 = vunpack.c.h.b16 %v710
    %v892 = vunpack.c.l.b16 %v711
    %v893 = vunpack.c.h.b16 %v711
    %v894 = vunpack.c.l.b16 %v712
    %v895 = vunpack.c.h.b16 %v712
    %v896 = vunpack.c.l.b16 %v713
    %v897 = vunpack.c.h.b16 %v713
    %v898 = vunpack.c.l.b16 %v714
    %v899 = vunpack.c.h.b16 %v714
    %v900 = vunpack.c.l.b16 %v715
    %v901 = vunpack.c.h.b16 %v715
    %v902 = vunpack.c.l.b16 %v716
    %v903 = vunpack.c.h.b16 %v716
    %v904 = vunpack.c.l.b16 %v717
    %v905 = vunpack.c.h.b16 %v717
    %v906 = vunpack.c.l.b16 %v718
    %v907 = vunpack.c.h.b16 %v718
    %v908 = vunpack.c.l.b16 %v719
    %v909 = vunpack.c.h.b16 %v719
    %v910 = vunpack.c.l.b16 %v720
    %v911 = vunpack.c.h.b16 %v720
    %v912 = vunpack.c.l.b16 %v721
    %v913 = vunpack.c.h.b16 %v721
    %v914 = vunpack.c.l.b16 %v722
    %v915 = vunpack.c.h.b16 %v722
    %v916 = vunpack.c.l.b16 %v723
    %v917 = vunpack.c.h.b16 %v723
    %v918 = vunpack.c.l.b16 %v724
    %v919 = vunpack.c.h.b16 %v724
    %v920 = vunpack.c.l.b16 %v725
    %v921 = vunpack.c.h.b16 %v725
    %v922 = vunpack.c.l.b16 %v726
    %v923 = vunpack.c.h.b16 %v726
    %v924 = vunpack.c.l.b16 %v727
    %v925 = vunpack.c.h.b16 %v727
    %v926 = vunpack.c.l.b16 %v728
    %v927 = vunpack.c.h.b16 %v728
    %v928 = vunpack.c.l.b16 %v729
    %v929 = vunpack.c.h.b16 %v729
    %v930 = vunpack.c.l.b16 %v730
    %v931 = vunpack.c.h.b16 %v730
    %v932 = vunpack.c.l.b16 %v731
    %v933 = vunpack.c.h.b16 %v731
    %v934 = vunpack.c.l.b16 %v732
    %v935 = vunpack.c.h.b16 %v732
    %v936 = vunpack.c.l.b16 %v733
    %v937 = vunpack.c.h.b16 %v733
    %v938 = vpack.c.b16 %v812, %v810
    %v939 = vpack.c.b16 %v813, %v811
    %v940 = vpack.c.b16 %v816, %v814
    %v941 = vpack.c.b16 %v817, %v815
    %v942 = vpack.c.b16 %v820, %v818
    %v943 = vpack.c.b16 %v821, %v819
    %v944 = vpack.c.b16 %v824, %v822
    %v945 = vpack.c.b16 %v825, %v823
    %v946 = vpack.c.b16 %v828, %v826
    %v947 = vpack.c.b16 %v829, %v827
    %v948 = vpack.c.b16 %v832, %v830
    %v949 = vpack.c.b16 %v833, %v831
    %v950 = vpack.c.b16 %v836, %v834
    %v951 = vpack.c.b16 %v837, %v835
    %v952 = vpack.c.b16 %v840, %v838
    %v953 = vpack.c.b16 %v841, %v839
    %v954 = vpack.c.b16 %v844, %v842
    %v955 = vpack.c.b16 %v845, %v843
    %v956 = vpack.c.b16 %v848, %v846
    %v957 = vpack.c.b16 %v849, %v847
    %v958 = vpack.c.b16 %v852, %v850
    %v959 = vpack.c.b16 %v853, %v851
    %v960 = vpack.c.b16 %v856, %v854
    %v961 = vpack.c.b16 %v857, %v855
    %v962 = vpack.c.b16 %v860, %v858
    %v963 = vpack.c.b16 %v861, %v859
    %v964 = vpack.c.b16 %v864, %v862
    %v965 = vpack.c.b16 %v865, %v863
    %v966 = vpack.c.b16 %v868, %v866
    %v967 = vpack.c.b16 %v869, %v867
    %v968 = vpack.c.b16 %v872, %v870
    %v969 = vpack.c.b16 %v873, %v871
    %v970 = vpack.c.b16 %v876, %v874
    %v971 = vpack.c.b16 %v877, %v875
    %v972 = vpack.c.b16 %v880, %v878
    %v973 = vpack.c.b16 %v881, %v879
    %v974 = vpack.c.b16 %v884, %v882
    %v975 = vpack.c.b16 %v885, %v883
    %v976 = vpack.c.b16 %v888, %v886
    %v977 = vpack.c.b16 %v889, %v887
    %v978 = vpack.c.b16 %v892, %v890
    %v979 = vpack.c.b16 %v893, %v891
    %v980 = vpack.c.b16 %v896, %v894
    %v981 = vpack.c.b16 %v897, %v895
    %v982 = vpack.c.b16 %v900, %v898
    %v983 = vpack.c.b16 %v901, %v899
    %v984 = vpack.c.b16 %v904, %v902
    %v985 = vpack.c.b16 %v905, %v903
    %v986 = vpack.c.b16 %v908, %v906
    %v987 = vpack.c.b16 %v909, %v907
    %v988 = vpack.c.b16 %v912, %v910
    %v989 = vpack.c.b16 %v913, %v911
    %v990 = vpack.c.b16 %v916, %v914
    %v991 = vpack.c.b16 %v917, %v915
    %v992 = vpack.c.b16 %v920, %v918
    %v993 = vpack.c.b16 %v921, %v919
    %v994 = vpack.c.b16 %v924, %v922
    %v995 = vpack.c.b16 %v925, %v923
    %v996 = vpack.c.b16 %v928, %v926
    %v997 = vpack.c.b16 %v929, %v927
    %v998 = vpack.c.b16 %v932, %v930
    %v999 = vpack.c.b16 %v933, %v931
    %v1000 = vpack.c.b16 %v936, %v934
    %v1001 = vpack.c.b16 %v937, %v935
    %1066 = vmatprep.subr.bf16.mxu0 %v939
    %1067 = vmatpush1.bf16.msra.mxu0 %v938
    %1068 = vmatprep.subr.bf16.mxu0 %v941
    %1069 = vmatpush1.bf16.msra.mxu0 %v940
    %1070 = vmatprep.subr.bf16.mxu0 %v943
    %1071 = vmatpush1.bf16.msra.mxu0 %v942
    %1072 = vmatprep.subr.bf16.mxu0 %v945
    %1073 = vmatpush1.bf16.msra.mxu0 %v944
    %1074 = vmatprep.subr.bf16.mxu0 %v947
    %1075 = vmatpush1.bf16.msra.mxu0 %v946
    %1076 = vmatprep.subr.bf16.mxu0 %v949
    %1077 = vmatpush1.bf16.msra.mxu0 %v948
    %1078 = vmatprep.subr.bf16.mxu0 %v951
    %1079 = vmatpush1.bf16.msra.mxu0 %v950
    %1080 = vmatprep.subr.bf16.mxu0 %v953
    %1081 = vmatpush1.bf16.msra.mxu0 %v952
    %1082 = vmatprep.subr.bf16.mxu0 %v955
    %1083 = vmatpush1.bf16.msra.mxu0 %v954
    %1084 = vmatprep.subr.bf16.mxu0 %v957
    %1085 = vmatpush1.bf16.msra.mxu0 %v956
    %1086 = vmatprep.subr.bf16.mxu0 %v959
    %1087 = vmatpush1.bf16.msra.mxu0 %v958
    %1088 = vmatprep.subr.bf16.mxu0 %v961
    %1089 = vmatpush1.bf16.msra.mxu0 %v960
    %1090 = vmatprep.subr.bf16.mxu0 %v963
    %1091 = vmatpush1.bf16.msra.mxu0 %v962
    %1092 = vmatprep.subr.bf16.mxu0 %v965
    %1093 = vmatpush1.bf16.msra.mxu0 %v964
    %1094 = vmatprep.subr.bf16.mxu0 %v967
    %1095 = vmatpush1.bf16.msra.mxu0 %v966
    %1096 = vmatprep.subr.bf16.mxu0 %v969
    %1097 = vmatpush1.bf16.msra.mxu0 %v968
    %1098 = vmatprep.mubr.bf16.mxu0 %v667
    %1099 = vmatmul.mubr.bf16.gmra.mrb[0].mxu0 %v666
    %v1100 = vpop.f32.mrb[0].mxu0
    %v1101 = vadd.f32 %v739, %v1100
    %v1102 = vpop.f32.mrb[0].mxu0
    %v1103 = vadd.f32 %v743, %v1102
    %v1104 = vpop.f32.mrb[0].mxu0
    %v1105 = vpop.f32.mrb[0].mxu0
    %1106 = vdwg.mxu0
    %1107 = vmatprep.subr.bf16.mxu0 %v971
    %1108 = vmatpush1.bf16.msra.mxu0 %v970
    %1109 = vmatprep.subr.bf16.mxu0 %v973
    %1110 = vmatpush1.bf16.msra.mxu0 %v972
    %1111 = vmatprep.subr.bf16.mxu0 %v975
    %1112 = vmatpush1.bf16.msra.mxu0 %v974
    %1113 = vmatprep.subr.bf16.mxu0 %v977
    %1114 = vmatpush1.bf16.msra.mxu0 %v976
    %1115 = vmatprep.subr.bf16.mxu0 %v979
    %1116 = vmatpush1.bf16.msra.mxu0 %v978
    %1117 = vmatprep.subr.bf16.mxu0 %v981
    %1118 = vmatpush1.bf16.msra.mxu0 %v980
    %1119 = vmatprep.subr.bf16.mxu0 %v983
    %1120 = vmatpush1.bf16.msra.mxu0 %v982
    %1121 = vmatprep.subr.bf16.mxu0 %v985
    %1122 = vmatpush1.bf16.msra.mxu0 %v984
    %1123 = vmatprep.subr.bf16.mxu0 %v987
    %1124 = vmatpush1.bf16.msra.mxu0 %v986
    %1125 = vmatprep.subr.bf16.mxu0 %v989
    %1126 = vmatpush1.bf16.msra.mxu0 %v988
    %1127 = vmatprep.subr.bf16.mxu0 %v991
    %1128 = vmatpush1.bf16.msra.mxu0 %v990
    %1129 = vmatprep.subr.bf16.mxu0 %v993
    %1130 = vmatpush1.bf16.msra.mxu0 %v992
    %1131 = vmatprep.subr.bf16.mxu0 %v995
    %1132 = vmatpush1.bf16.msra.mxu0 %v994
    %1133 = vmatprep.subr.bf16.mxu0 %v997
    %1134 = vmatpush1.bf16.msra.mxu0 %v996
    %1135 = vmatprep.subr.bf16.mxu0 %v999
    %1136 = vmatpush1.bf16.msra.mxu0 %v998
    %1137 = vmatprep.subr.bf16.mxu0 %v1001
    %1138 = vmatpush1.bf16.msra.mxu0 %v1000
    %1139 = vmatprep.mubr.bf16.mxu0 %v669
    %1140 = vmatmul.mubr.bf16.gmra.mrb[0].mxu0 %v668
    %v1141 = vpop.f32.mrb[0].mxu0
    %v1142 = vadd.f32 %v1101, %v1141
    %v1143 = vpop.f32.mrb[0].mxu0
    %v1144 = vadd.f32 %v1103, %v1143
    %v1145 = vpop.f32.mrb[0].mxu0
    %v1146 = vpop.f32.mrb[0].mxu0
    %1147 = vdwg.mxu0
    %v1148 = vmax.f32 %v1142, 0.0
    %v1149 = vmax.f32 %v1144, 0.0
    %v1150 = vpack.c.bf16 %v1148, %v1148
    %v1151 = vpack.c.bf16 %v1149, %v1149
    %v1152 = vld [vmem:[#allocation10] sm:$0xf]
    %v1153 = vld [vmem:[#allocation10 + $0x4] sm:$0xf]
    %v1154 = vld [vmem:[#allocation10 + $0x8] sm:$0xf]
    %v1155 = vld [vmem:[#allocation10 + $0xc] sm:$0xf]
    %v1156 = vld [vmem:[#allocation10 + $0x10] sm:$0xf]
    %v1157 = vld [vmem:[#allocation10 + $0x14] sm:$0xf]
    %v1158 = vld [vmem:[#allocation10 + $0x18] sm:$0xf]
    %v1159 = vld [vmem:[#allocation10 + $0x1c] sm:$0xf]
    %v1160 = vld [vmem:[#allocation10 + $0x20] sm:$0xf]
    %v1161 = vld [vmem:[#allocation10 + $0x24] sm:$0xf]
    %v1162 = vld [vmem:[#allocation10 + $0x28] sm:$0xf]
    %v1163 = vld [vmem:[#allocation10 + $0x2c] sm:$0xf]
    %v1164 = vld [vmem:[#allocation10 + $0x30] sm:$0xf]
    %v1165 = vld [vmem:[#allocation10 + $0x34] sm:$0xf]
    %v1166 = vld [vmem:[#allocation10 + $0x38] sm:$0xf]
    %v1167 = vld [vmem:[#allocation10 + $0x3c] sm:$0xf]
    %v1168 = vld [vmem:[#allocation10 + $0x40] sm:$0xf]
    %v1169 = vld [vmem:[#allocation10 + $0x44] sm:$0xf]
    %v1170 = vld [vmem:[#allocation10 + $0x48] sm:$0xf]
    %v1171 = vld [vmem:[#allocation10 + $0x4c] sm:$0xf]
    %v1172 = vld [vmem:[#allocation10 + $0x50] sm:$0xf]
    %v1173 = vld [vmem:[#allocation10 + $0x54] sm:$0xf]
    %v1174 = vld [vmem:[#allocation10 + $0x58] sm:$0xf]
    %v1175 = vld [vmem:[#allocation10 + $0x5c] sm:$0xf]
    %v1176 = vld [vmem:[#allocation10 + $0x60] sm:$0xf]
    %v1177 = vld [vmem:[#allocation10 + $0x64] sm:$0xf]
    %v1178 = vld [vmem:[#allocation10 + $0x68] sm:$0xf]
    %v1179 = vld [vmem:[#allocation10 + $0x6c] sm:$0xf]
    %v1180 = vld [vmem:[#allocation10 + $0x70] sm:$0xf]
    %v1181 = vld [vmem:[#allocation10 + $0x74] sm:$0xf]
    %v1182 = vld [vmem:[#allocation10 + $0x78] sm:$0xf]
    %v1183 = vld [vmem:[#allocation10 + $0x7c] sm:$0xf]
    %v1184 = vld [vmem:[%s8] sm:$0x1]
    %v1186 = vlaneseq
    %v1187 = vshrl.u32 %v1186, 7
    %v1188 = vsub.s32 0, %v1187
    %v1189 = vrot.slane %v1184, %v1188
    %v1223 = vunpack.c.l.b16 %v1152
    %v1224 = vunpack.c.l.b16 %v1153
    %v1225 = vunpack.c.l.b16 %v1154
    %v1226 = vunpack.c.l.b16 %v1155
    %v1227 = vunpack.c.l.b16 %v1156
    %v1228 = vunpack.c.l.b16 %v1157
    %v1229 = vunpack.c.l.b16 %v1158
    %v1230 = vunpack.c.l.b16 %v1159
    %v1231 = vunpack.c.l.b16 %v1160
    %v1232 = vunpack.c.l.b16 %v1161
    %v1233 = vunpack.c.l.b16 %v1162
    %v1234 = vunpack.c.l.b16 %v1163
    %v1235 = vunpack.c.l.b16 %v1164
    %v1236 = vunpack.c.l.b16 %v1165
    %v1237 = vunpack.c.l.b16 %v1166
    %v1238 = vunpack.c.l.b16 %v1167
    %v1239 = vunpack.c.l.b16 %v1168
    %v1240 = vunpack.c.l.b16 %v1169
    %v1241 = vunpack.c.l.b16 %v1170
    %v1242 = vunpack.c.l.b16 %v1171
    %v1243 = vunpack.c.l.b16 %v1172
    %v1244 = vunpack.c.l.b16 %v1173
    %v1245 = vunpack.c.l.b16 %v1174
    %v1246 = vunpack.c.l.b16 %v1175
    %v1247 = vunpack.c.l.b16 %v1176
    %v1248 = vunpack.c.l.b16 %v1177
    %v1249 = vunpack.c.l.b16 %v1178
    %v1250 = vunpack.c.l.b16 %v1179
    %v1251 = vunpack.c.l.b16 %v1180
    %v1252 = vunpack.c.l.b16 %v1181
    %v1253 = vunpack.c.l.b16 %v1182
    %v1254 = vunpack.c.l.b16 %v1183
    %v1255 = vpack.c.b16 %v1224, %v1223
    %v1256 = vpack.c.b16 %v1226, %v1225
    %v1257 = vpack.c.b16 %v1228, %v1227
    %v1258 = vpack.c.b16 %v1230, %v1229
    %v1259 = vpack.c.b16 %v1232, %v1231
    %v1260 = vpack.c.b16 %v1234, %v1233
    %v1261 = vpack.c.b16 %v1236, %v1235
    %v1262 = vpack.c.b16 %v1238, %v1237
    %v1263 = vpack.c.b16 %v1240, %v1239
    %v1264 = vpack.c.b16 %v1242, %v1241
    %v1265 = vpack.c.b16 %v1244, %v1243
    %v1266 = vpack.c.b16 %v1246, %v1245
    %v1267 = vpack.c.b16 %v1248, %v1247
    %v1268 = vpack.c.b16 %v1250, %v1249
    %v1269 = vpack.c.b16 %v1252, %v1251
    %v1270 = vpack.c.b16 %v1254, %v1253
    %1287 = vmatprep.subr.bf16.mxu0 0
    %1288 = vmatpush1.bf16.msra.mxu0 %v1255
    %1289 = vmatprep.subr.bf16.mxu0 0
    %1290 = vmatpush1.bf16.msra.mxu0 %v1256
    %1291 = vmatprep.subr.bf16.mxu0 0
    %1292 = vmatpush1.bf16.msra.mxu0 %v1257
    %1293 = vmatprep.subr.bf16.mxu0 0
    %1294 = vmatpush1.bf16.msra.mxu0 %v1258
    %1295 = vmatprep.subr.bf16.mxu0 0
    %1296 = vmatpush1.bf16.msra.mxu0 %v1259
    %1297 = vmatprep.subr.bf16.mxu0 0
    %1298 = vmatpush1.bf16.msra.mxu0 %v1260
    %1299 = vmatprep.subr.bf16.mxu0 0
    %1300 = vmatpush1.bf16.msra.mxu0 %v1261
    %1301 = vmatprep.subr.bf16.mxu0 0
    %1302 = vmatpush1.bf16.msra.mxu0 %v1262
    %1303 = vmatprep.subr.bf16.mxu0 0
    %1304 = vmatpush1.bf16.msra.mxu0 %v1263
    %1305 = vmatprep.subr.bf16.mxu0 0
    %1306 = vmatpush1.bf16.msra.mxu0 %v1264
    %1307 = vmatprep.subr.bf16.mxu0 0
    %1308 = vmatpush1.bf16.msra.mxu0 %v1265
    %1309 = vmatprep.subr.bf16.mxu0 0
    %1310 = vmatpush1.bf16.msra.mxu0 %v1266
    %1311 = vmatprep.subr.bf16.mxu0 0
    %1312 = vmatpush1.bf16.msra.mxu0 %v1267
    %1313 = vmatprep.subr.bf16.mxu0 0
    %1314 = vmatpush1.bf16.msra.mxu0 %v1268
    %1315 = vmatprep.subr.bf16.mxu0 0
    %1316 = vmatpush1.bf16.msra.mxu0 %v1269
    %1317 = vmatprep.subr.bf16.mxu0 0
    %1318 = vmatpush1.bf16.msra.mxu0 %v1270
    %1319 = vmatprep.mubr.bf16.mxu0 %v1151
    %1320 = vmatmul.mubr.bf16.gmra.mrb[0].mxu0 %v1150
    %v1321 = vpop.f32.mrb[0].mxu0
    %v1322 = vadd.f32 %v1189, %v1321
    %v1323 = vpop.f32.mrb[0].mxu0
    %v1324 = vpop.f32.mrb[0].mxu0
    %v1325 = vpop.f32.mrb[0].mxu0
    %1326 = vdwg.mxu0
    %1327 = vst [vmem:[#allocation11] sm:$0xff] %v1322
    // Predicated region
    $region58: #{tpu_custom_call.1} parent=1 // pred_check
      _
    $region59: #{tpu_custom_call.1} parent=1 // pred_check_branch
      %1329 = sbr.rel (0) target = $region61
    $region60: #{tpu_custom_call.1} parent=1 // pred_region
      %s1331 = ssub.s32 128, 128
      %1332 = vsyncadd [#allocation4], %s1331
      %s1334 = sshll.u32 [#allocation11], 4
      %s1335 = int_to_ptr.vmem [resolvable:$true] %s1334
      %1337 = dma.vmem_to_hbm [thread:$0]  %s1335, 128, %s9, [#allocation4]
    $region61: #{tpu_custom_call.1} parent=1 // pred_fallthru
      _
    // Predicated region
    $region62: #{tpu_custom_call.1} parent=1 // pred_check
      _
    $region63: #{tpu_custom_call.1} parent=1 // pred_check_branch
      %1339 = sbr.rel (0) target = $region65
    $region64: #{tpu_custom_call.1} parent=1 // pred_region
      %1340 = dma.done [#allocation4], 128
    $region65: #{tpu_custom_call.1} parent=1 // pred_fallthru
      _
    %1341 = vsyncpa [#allocation3], 1
    %1342 = vsyncpa [#allocation6], 1
    %1343 = vsyncpa [#allocation9], 1
    %1344 = vsyncpa [#allocation4], 1

</llo_original>
